<compile_context>
chip_gen: v5e
topology: v5e:2x2
jax: 0.10.0
libtpu: 0.0.40
codegen_flags: <defaults>
</compile_context>

<pallas_src>
import functools

import jax
import jax.numpy as jnp
from jax import lax
from jax.experimental import pallas as pl
from jax.experimental.pallas import tpu as pltpu


def _kldiv_tile_kernel(x_ref, y_ref, o_ref, *, n_rows, tile_rows, mask_rows):
    """One batch tile -> one f32 partial sum of KL(softmax(y) || softmax(x))."""
    x = x_ref[...].astype(jnp.float32)
    y = y_ref[...].astype(jnp.float32)

    # log_softmax(x) pieces (numerically stable).
    x_shift = x - jnp.max(x, axis=1, keepdims=True)
    sx = jnp.sum(jnp.exp(x_shift), axis=1, keepdims=True)   # sum exp(x - max)

    # softmax(y) pieces (numerically stable).
    y_shift = y - jnp.max(y, axis=1, keepdims=True)
    ey = jnp.exp(y_shift)
    sy = jnp.sum(ey, axis=1, keepdims=True)

    # Per-row KL restructured so divides / logs are per-ROW scalars:
    #   sum_j q_j (log q_j - log p_j)
    #     = (1/sy) * sum_j ey_j * (y_shift_j - x_shift_j) + log(sx / sy)
    # Guard q_j == 0 (y_j == -inf): 0 * log(0) := 0 (matches torch's kl_div).
    prod = ey * (y_shift - x_shift)
    prod = jnp.where(ey > 0.0, prod, 0.0)
    num = jnp.sum(prod, axis=1, keepdims=True)

    inv_sy = pl.reciprocal(sy, approx=True)        # EUP
    inv_sy = inv_sy * (2.0 - sy * inv_sy)          # one Newton step -> ~f32 exact
    kl_row = num * inv_sy + jnp.log(sx * inv_sy)   # single log per row

    if mask_rows:
        # Ragged last tile: zero out rows past the true batch size.
        row0 = pl.program_id(0) * tile_rows
        row_ids = row0 + lax.broadcasted_iota(jnp.int32, (kl_row.shape[0], 1), 0)
        kl_row = jnp.where(row_ids < n_rows, kl_row, 0.0)

    # One partial per tile, written into a fully (8,128)-aligned lane-dense
    # block: element [0,0] carries the sum, everything else is exactly 0, so
    # jnp.sum of the whole output in the wrapper recovers the total exactly
    # and every store is an unmasked vst.
    tile_sum = jnp.sum(kl_row)
    r = lax.broadcasted_iota(jnp.int32, (8, 128), 0)
    c = lax.broadcasted_iota(jnp.int32, (8, 128), 1)
    o_ref[...] = jnp.where((r == 0) & (c == 0), tile_sum, 0.0)


def _round_up(v, m):
    return ((v + m - 1) // m) * m


def _sublane_align(itemsize):
    # f32 packs (8,128) per vreg; bf16 (16,128); 8-bit dtypes (32,128).
    return {4: 8, 2: 16, 1: 32}.get(int(itemsize), 8)


def _vmem_capacity_bytes():
    try:
        return int(pltpu.get_tpu_info().vmem_capacity_bytes)
    except Exception:
        return 64 * 1024 * 1024  # conservative (v7x-sized VMEM)


def _pick_tile_rows(n, c, itemsize, *, target_bytes):
    """Sublane-aligned row tile holding ~target_bytes of ONE input tile."""
    align = _sublane_align(itemsize)
    rows = max(align, target_bytes // max(1, c * itemsize))
    rows = (rows // align) * align
    if rows >= n:
        # Whole batch fits in one tile.  If there is enough work to amortize
        # one extra ~0.35us grid step, split into two tiles anyway so the
        # "parallel" grid axis can be sharded across v7x's two TensorCores.
        half = _round_up((n + 1) // 2, align)
        if half < n and n * c * itemsize >= (1 << 20):
            return half
        return n
    return rows


def kldiv_with_logits(x, y, *, tile_rows=None):
    """Pallas implementation of KLDivWithLogits.forward(x, y).

    x, y: (N, C) logits.  Keep them in bf16 at the caller if possible (the
    kernel upcasts to f32 internally; bf16 halves HBM bytes of this
    HBM-bound kernel).  Returns a scalar float32.
    """
    assert x.shape == y.shape and x.ndim == 2, "expected matching (N, C) logits"
    n, c = x.shape
    itemsize = jnp.dtype(x.dtype).itemsize
    align = _sublane_align(itemsize)

    # Generation-aware budgets: v5e/v6e have 128 MiB VMEM, v7x only 64 MiB.
    vmem_cap = _vmem_capacity_bytes()
    if vmem_cap >= 100 * 1024 * 1024:
        target_bytes, vmem_limit = 6 * 1024 * 1024, 96 * 1024 * 1024
    else:
        target_bytes, vmem_limit = 3 * 1024 * 1024, 40 * 1024 * 1024

    if tile_rows is None:
        tile_rows = _pick_tile_rows(n, c, itemsize, target_bytes=target_bytes)
    else:
        tile_rows = max(1, min(int(tile_rows), n))
        if tile_rows < n:
            tile_rows = max(align, (tile_rows // align) * align)
            tile_rows = min(tile_rows, n)

    num_tiles = pl.cdiv(n, tile_rows)
    mask_rows = (n % tile_rows) != 0

    kernel = functools.partial(
        _kldiv_tile_kernel, n_rows=n, tile_rows=tile_rows, mask_rows=mask_rows)

    in_spec = pl.BlockSpec((tile_rows, c), lambda i: (i, 0))
    # Per-tile partials: one (8,128) lane-dense f32 block per grid step
    # (fully aligned -> unmasked stores; only 4 KiB/tile of extra HBM).
    out_spec = pl.BlockSpec((8, 128), lambda i: (i, 0))

    cost = pl.CostEstimate(
        flops=8 * n * c,
        transcendentals=2 * n * c + 2 * n,
        bytes_accessed=2 * n * c * itemsize + num_tiles * 8 * 128 * 4,
    )

    partials = pl.pallas_call(
        kernel,
        out_shape=jax.ShapeDtypeStruct((num_tiles * 8, 128), jnp.float32),
        grid_spec=pltpu.PrefetchScalarGridSpec(
            num_scalar_prefetch=0,
            grid=(num_tiles,),
            in_specs=[in_spec, in_spec],
            out_specs=out_spec,
        ),
        compiler_params=pltpu.CompilerParams(
            dimension_semantics=("parallel",),
            vmem_limit_bytes=vmem_limit,
        ),
        cost_estimate=cost,
    )(x, y)

    # All non-[0,0] elements of every tile block are exact zeros, so a plain
    # sum recovers the total; the /N is applied exactly once, here.
    return jnp.sum(partials) / jnp.float32(n)


def _ref_loss(x, y):
    log_p = jax.nn.log_softmax(x, axis=1)
    q = jax.nn.softmax(y, axis=1)
    return jnp.sum(q * (jnp.log(q) - log_p)) / x.shape[0]


if __name__ == "__main__":
    key = jax.random.PRNGKey(0)
    kx, ky = jax.random.split(key)

    # Small shapes consistent with the module: (batch, num_classes) logits.
    N, C = 8, 32
    x = jax.random.normal(kx, (N, C), dtype=jnp.float32)
    y = jax.random.normal(ky, (N, C), dtype=jnp.float32)

    loss = kldiv_with_logits(x, y)
    jax.block_until_ready(loss)
    ref = _ref_loss(x, y)
    assert jnp.allclose(loss, ref, atol=1e-4, rtol=1e-4), (loss, ref)

    # Multi-tile path with a ragged (masked) last tile.
    N2, C2 = 100, 128
    x2 = jax.random.normal(jax.random.PRNGKey(1), (N2, C2), dtype=jnp.float32)
    y2 = jax.random.normal(jax.random.PRNGKey(2), (N2, C2), dtype=jnp.float32)
    loss2 = kldiv_with_logits(x2, y2, tile_rows=32)  # 4 tiles, ragged last tile
    jax.block_until_ready(loss2)
    ref2 = _ref_loss(x2, y2)
    assert jnp.allclose(loss2, ref2, atol=1e-4, rtol=1e-4), (loss2, ref2)

    # bf16 logits end-to-end (halves HBM traffic; kernel computes in f32).
    N3, C3 = 256, 256
    x3 = jax.random.normal(jax.random.PRNGKey(3), (N3, C3),
                           dtype=jnp.float32).astype(jnp.bfloat16)
    y3 = jax.random.normal(jax.random.PRNGKey(4), (N3, C3),
                           dtype=jnp.float32).astype(jnp.bfloat16)
    loss3 = kldiv_with_logits(x3, y3)
    jax.block_until_ready(loss3)
    ref3 = _ref_loss(x3.astype(jnp.float32), y3.astype(jnp.float32))
    assert jnp.allclose(loss3, ref3, atol=1e-3, rtol=1e-3), (loss3, ref3)

    print("KERNEL_OK")
</pallas_src>

<mosaic_0001>
module attributes {stable_mosaic.version = 11 : i64} {
  func.func @_kldiv_tile_kernel(%arg0: i32, %arg1: memref<8x32xf32, #tpu.memory_space<vmem>>, %arg2: memref<8x32xf32, #tpu.memory_space<vmem>>, %arg3: memref<8x128xf32, #tpu.memory_space<vmem>>) attributes {dimension_semantics = [#tpu.dimension_semantics<parallel>], iteration_bounds = array<i64: 1>, scalar_prefetch = 0 : i64, scratch_operands = 0 : i64, tpu.core_type = #tpu.core_type<tc>, window_params = [{transform_indices = @transform_0, window_bounds = array<i64: 8, 32>}, {transform_indices = @transform_1, window_bounds = array<i64: 8, 32>}, {transform_indices = @transform_2, window_bounds = array<i64: 8, 128>}]} {
    %c0 = arith.constant 0 : index
    %c0_0 = arith.constant 0 : index
    %0 = vector.load %arg1[%c0, %c0_0] : memref<8x32xf32, #tpu.memory_space<vmem>>, vector<8x32xf32>
    %c0_1 = arith.constant 0 : index
    %c0_2 = arith.constant 0 : index
    %1 = vector.load %arg2[%c0_1, %c0_2] : memref<8x32xf32, #tpu.memory_space<vmem>>, vector<8x32xf32>
    %cst = arith.constant dense<0xFF800000> : vector<8xf32>
    %2 = vector.multi_reduction <maximumf>, %0, %cst [1] : vector<8x32xf32> to vector<8xf32>
    %3 = vector.shape_cast %2 : vector<8xf32> to vector<8x1xf32>
    %4 = vector.broadcast %3 : vector<8x1xf32> to vector<8x32xf32>
    %5 = arith.subf %0, %4 : vector<8x32xf32>
    %6 = math.exp %5 : vector<8x32xf32>
    %cst_3 = arith.constant dense<0.000000e+00> : vector<8xf32>
    %7 = vector.multi_reduction <add>, %6, %cst_3 [1] : vector<8x32xf32> to vector<8xf32>
    %8 = vector.shape_cast %7 : vector<8xf32> to vector<8x1xf32>
    %cst_4 = arith.constant dense<0xFF800000> : vector<8xf32>
    %9 = vector.multi_reduction <maximumf>, %1, %cst_4 [1] : vector<8x32xf32> to vector<8xf32>
    %10 = vector.shape_cast %9 : vector<8xf32> to vector<8x1xf32>
    %11 = vector.broadcast %10 : vector<8x1xf32> to vector<8x32xf32>
    %12 = arith.subf %1, %11 : vector<8x32xf32>
    %13 = math.exp %12 : vector<8x32xf32>
    %cst_5 = arith.constant dense<0.000000e+00> : vector<8xf32>
    %14 = vector.multi_reduction <add>, %13, %cst_5 [1] : vector<8x32xf32> to vector<8xf32>
    %15 = vector.shape_cast %14 : vector<8xf32> to vector<8x1xf32>
    %16 = arith.subf %12, %5 : vector<8x32xf32>
    %17 = arith.mulf %13, %16 : vector<8x32xf32>
    %cst_6 = arith.constant 0.000000e+00 : f32
    %18 = vector.broadcast %cst_6 : f32 to vector<8x32xf32>
    %19 = arith.cmpf ogt, %13, %18 : vector<8x32xf32>
    %cst_7 = arith.constant 0.000000e+00 : f32
    %20 = vector.broadcast %cst_7 : f32 to vector<8x32xf32>
    %21 = arith.select %19, %17, %20 : vector<8x32xi1>, vector<8x32xf32>
    %cst_8 = arith.constant dense<0.000000e+00> : vector<8xf32>
    %22 = vector.multi_reduction <add>, %21, %cst_8 [1] : vector<8x32xf32> to vector<8xf32>
    %23 = vector.shape_cast %22 : vector<8xf32> to vector<8x1xf32>
    %24 = tpu.reciprocal %15 {approx = true} : vector<8x1xf32> -> vector<8x1xf32>
    %25 = arith.mulf %15, %24 : vector<8x1xf32>
    %cst_9 = arith.constant 2.000000e+00 : f32
    %26 = vector.broadcast %cst_9 : f32 to vector<8x1xf32>
    %27 = arith.subf %26, %25 : vector<8x1xf32>
    %28 = arith.mulf %24, %27 : vector<8x1xf32>
    %29 = arith.mulf %23, %28 : vector<8x1xf32>
    %30 = arith.mulf %8, %28 : vector<8x1xf32>
    %31 = math.log %30 : vector<8x1xf32>
    %32 = arith.addf %29, %31 : vector<8x1xf32>
    %33 = vector.shape_cast %32 : vector<8x1xf32> to vector<1x8x1xf32>
    %cst_10 = arith.constant dense<0.000000e+00> : vector<1xf32>
    %34 = vector.multi_reduction <add>, %33, %cst_10 [1, 2] : vector<1x8x1xf32> to vector<1xf32>
    %35 = vector.shape_cast %34 : vector<1xf32> to vector<1x1x1xf32>
    %36 = vector.extract %35[0, 0, 0] : f32 from vector<1x1x1xf32>
    %37 = tpu.iota {dimensions = array<i32: 0>} : vector<8x128xi32>
    %38 = tpu.iota {dimensions = array<i32: 1>} : vector<8x128xi32>
    %c0_i32 = arith.constant 0 : i32
    %39 = vector.broadcast %c0_i32 : i32 to vector<8x128xi32>
    %40 = arith.cmpi eq, %37, %39 : vector<8x128xi32>
    %c0_i32_11 = arith.constant 0 : i32
    %41 = vector.broadcast %c0_i32_11 : i32 to vector<8x128xi32>
    %42 = arith.cmpi eq, %38, %41 : vector<8x128xi32>
    %43 = arith.andi %40, %42 : vector<8x128xi1>
    %cst_12 = arith.constant 0.000000e+00 : f32
    %44 = vector.broadcast %36 : f32 to vector<8x128xf32>
    %45 = vector.broadcast %cst_12 : f32 to vector<8x128xf32>
    %46 = arith.select %43, %44, %45 : vector<8x128xi1>, vector<8x128xf32>
    %c0_13 = arith.constant 0 : index
    %c0_14 = arith.constant 0 : index
    %47 = vector.load %arg3[%c0_13, %c0_14] : memref<8x128xf32, #tpu.memory_space<vmem>>, vector<8x128xf32>
    tpu.vector_store %arg3[%c0_13, %c0_14], %46 {strides = array<i32>} : memref<8x128xf32, #tpu.memory_space<vmem>>, vector<8x128xf32>,
    return
  }
  func.func @transform_0(%arg0: i32) -> (i32, i32) {
    %c0_i32 = arith.constant 0 : i32
    %c0_i32_0 = arith.constant 0 : i32
    return %arg0, %c0_i32 : i32, i32
  }
  func.func @transform_1(%arg0: i32) -> (i32, i32) {
    %c0_i32 = arith.constant 0 : i32
    %c0_i32_0 = arith.constant 0 : i32
    return %arg0, %c0_i32 : i32, i32
  }
  func.func @transform_2(%arg0: i32) -> (i32, i32) {
    %c0_i32 = arith.constant 0 : i32
    %c0_i32_0 = arith.constant 0 : i32
    return %arg0, %c0_i32 : i32, i32
  }
}

</mosaic_0001>

<llo_original>
// kernel: tpu_custom_call.1
$region0: #{tpu_custom_call.1}
  #allocation0 [shape = 'u32[]', space=smem, size = 0x4, offset = 0x4, fixed_abs, tag = 'smem constant byte address 0x4 - core index']
  #allocation1 [shape = 'u32[72,128]{1,0:T(1,128)}', space=vmem, size = 0x9000, scoped, tag = 'internal scratch']
  %s0 = inlined_call_operand.hbm [shape: f32[8,32], index: 0, kind: input, shape index: {}]
  %s1 = inlined_call_operand.hbm [shape: f32[8,32], index: 1, kind: input, shape index: {}]
  %s2 = inlined_call_operand.hbm [shape: f32[8,128], index: 2, kind: output, shape index: {}]
  %s3 = sld [smem:[#allocation0]]
  $region26: #{tpu_custom_call.1} parent=0
    _
  %s5 = ssub.s32 1, %s3
  %s6 = scalar_select 0, %s5, %s3
  $region1: #{tpu_custom_call.1} parent=0
    #allocation2 [shape = 'u8[4096]{0}', space=vmem, size = 0x1000, scoped, tag = 'input window, operand 0, single buffered']
    #allocation3 [shape = 's32[1]{0}', space=sflag, size = 0x4, scoped, tag = 'scoped memory for tpu_custom_call.1']
    #allocation4 [shape = 's32[1]{0}', space=sflag, size = 0x4, scoped, tag = 'scoped memory for tpu_custom_call.1']
    #allocation5 [shape = 'u8[4096]{0}', space=vmem, size = 0x1000, scoped, tag = 'input window, operand 1, single buffered']
    #allocation6 [shape = 's32[1]{0}', space=sflag, size = 0x4, scoped, tag = 'scoped memory for tpu_custom_call.1']
    #allocation7 [shape = 'u8[4096]{0}', space=vmem, size = 0x1000, scoped, tag = 'output window, operand 0, single buffered']
    %7 = vsyncpa [#allocation3], 0
    %8 = vsyncpa [#allocation6], 0
    %9 = vsyncpa [#allocation4], 0
    // Predicated region
    $region2: #{tpu_custom_call.1} parent=1 // pred_check
      _
    $region3: #{tpu_custom_call.1} parent=1 // pred_check_branch
      %11 = sbr.rel (0) target = $region5
    $region4: #{tpu_custom_call.1} parent=1 // pred_region
      %13 = vsyncadd [#allocation3], 0
      %s15 = sshll.u32 %s0, 4
      %s16 = int_to_ptr.hbm [resolvable:$true] %s15
      %s17 = sshll.u32 [#allocation2], 4
      %s18 = int_to_ptr.vmem [resolvable:$true] %s17
      %20 = dma.hbm_to_vmem [thread:$0]  %s16, 128, %s18, [#allocation3]
    $region5: #{tpu_custom_call.1} parent=1 // pred_fallthru
      _
    // Predicated region
    $region6: #{tpu_custom_call.1} parent=1 // pred_check
      _
    $region7: #{tpu_custom_call.1} parent=1 // pred_check_branch
      %22 = sbr.rel (0) target = $region9
    $region8: #{tpu_custom_call.1} parent=1 // pred_region
      %24 = vsyncadd [#allocation6], 0
      %s26 = sshll.u32 %s1, 4
      %s27 = int_to_ptr.hbm [resolvable:$true] %s26
      %s28 = sshll.u32 [#allocation5], 4
      %s29 = int_to_ptr.vmem [resolvable:$true] %s28
      %31 = dma.hbm_to_vmem [thread:$0]  %s27, 128, %s29, [#allocation6]
    $region9: #{tpu_custom_call.1} parent=1 // pred_fallthru
      _
    // Predicated region
    $region10: #{tpu_custom_call.1} parent=1 // pred_check
      _
    $region11: #{tpu_custom_call.1} parent=1 // pred_check_branch
      %33 = sbr.rel (0) target = $region13
    $region12: #{tpu_custom_call.1} parent=1 // pred_region
      %35 = dma.done [#allocation3], 128
    $region13: #{tpu_custom_call.1} parent=1 // pred_fallthru
      _
    // Predicated region
    $region14: #{tpu_custom_call.1} parent=1 // pred_check
      _
    $region15: #{tpu_custom_call.1} parent=1 // pred_check_branch
      %37 = sbr.rel (0) target = $region17
    $region16: #{tpu_custom_call.1} parent=1 // pred_region
      %39 = dma.done [#allocation6], 128
    $region17: #{tpu_custom_call.1} parent=1 // pred_fallthru
      _
    %v40 = vld [vmem:[#allocation2] sm:$0xff]
    %v41 = vld [vmem:[#allocation5] sm:$0xff]
    %vm42 = vcmask 261120
    %v43 = vsel %vm42, %v40, -inf
    %44 = vmax.xlane.f32.xlu0 %v43
    %v45 = vpop.xlane.xlu0 %44
    %v46 = vsub.f32 %v40, %v45
    %v47 = vmul.f32 %v46, 1.442695
    %v48 = vpow.pop %v47
    %v49 = vsel %vm42, %v48, 0.0
    %50 = vadd.xlane.f32.xlu0 %v49
    %v51 = vpop.xlane.xlu0 %50
    %v52 = vsel %vm42, %v41, -inf
    %53 = vmax.xlane.f32.xlu0 %v52
    %v54 = vpop.xlane.xlu0 %53
    %v55 = vsub.f32 %v41, %v54
    %v56 = vmul.f32 %v55, 1.442695
    %v57 = vpow.pop %v56
    %v58 = vsel %vm42, %v57, 0.0
    %59 = vadd.xlane.f32.xlu0 %v58
    %v60 = vpop.xlane.xlu0 %59
    %v61 = vsub.f32 %v55, %v46
    %v62 = vmul.f32 %v57, %v61
    %vm63 = vcmp.gt.f32.partialorder %v57, 0.0
    %v64 = vsel %vm63, %v62, 0.0
    %v65 = vsel %vm42, %v64, 0.0
    %66 = vadd.xlane.f32.xlu0 %v65
    %v67 = vpop.xlane.xlu0 %66
    %v68 = vrcp.pop %v60
    %v69 = vmul.f32 %v60, %v68
    %v70 = vsub.f32 2.0, %v69
    %v71 = vmul.f32 %v68, %v70
    %v72 = vmul.f32 %v67, %v71
    %v73 = vmul.f32 %v51, %v71
    %v74 = vlog2.pop %v73
    %v75 = vmul.f32 %v74, 0.6931472
    %v76 = vadd.f32 %v72, %v75
    %vm77 = vcmask 7168
    %v78 = vsel %vm77, %v76, 0.0
    %79 = vadd.xlane.f32.xlu0 %v78
    %v80 = vpop.xlane.xlu0 %79
    %v81 = vrot.slane %v80, 4
    %v82 = vadd.f32 %v80, %v81
    %v83 = vrot.slane %v82, 2
    %v84 = vadd.f32 %v82, %v83
    %v85 = vrot.slane %v84, 1
    %v86 = vadd.f32 %v84, %v85
    %s87 = vtos %v86
    %v88 = vlaneseq
    %v89 = vshrl.u32 %v88, 7
    %v90 = vlaneseq
    %v91 = vand.u32 %v90, 127
    %vm92 = vcmp.eq.s32.totalorder %v89, 0
    %vm93 = vcmp.eq.s32.totalorder %v91, 0
    %vm94 = vmand %vm92, %vm93
    %v95 = vstv %s87
    %v96 = vsel %vm94, %v95, 0.0
    %97 = vst [vmem:[#allocation7] sm:$0xff] %v96
    // Predicated region
    $region18: #{tpu_custom_call.1} parent=1 // pred_check
      _
    $region19: #{tpu_custom_call.1} parent=1 // pred_check_branch
      %99 = sbr.rel (0) target = $region21
    $region20: #{tpu_custom_call.1} parent=1 // pred_region
      %101 = vsyncadd [#allocation4], 0
      %s103 = sshll.u32 [#allocation7], 4
      %s104 = int_to_ptr.vmem [resolvable:$true] %s103
      %s105 = sshll.u32 %s2, 4
      %s106 = int_to_ptr.hbm [resolvable:$true] %s105
      %108 = dma.vmem_to_hbm [thread:$0]  %s104, 128, %s106, [#allocation4]
    $region21: #{tpu_custom_call.1} parent=1 // pred_fallthru
      _
    // Predicated region
    $region22: #{tpu_custom_call.1} parent=1 // pred_check
      _
    $region23: #{tpu_custom_call.1} parent=1 // pred_check_branch
      %110 = sbr.rel (0) target = $region25
    $region24: #{tpu_custom_call.1} parent=1 // pred_region
      %112 = dma.done [#allocation4], 128
    $region25: #{tpu_custom_call.1} parent=1 // pred_fallthru
      _
    %113 = vsyncpa [#allocation3], 1
    %114 = vsyncpa [#allocation6], 1
    %115 = vsyncpa [#allocation4], 1

</llo_original>
